<compile_context>
chip_gen: v7x
topology: tpu7x:2x2x1
jax: 0.10.0
libtpu: 0.0.40
codegen_flags: <defaults>
</compile_context>

<pallas_src>
import functools

import jax
import jax.numpy as jnp
from jax import lax
from jax.experimental import pallas as pl
from jax.experimental.pallas import tpu as pltpu

_EPS = 1e-8   # PyTorch F.cosine_similarity default eps


def _chip_params():
    """Returns (num_tensorcores, per_input_tile_bytes) for the local TPU."""
    try:
        kind = jax.devices()[0].device_kind.lower().replace(" ", "")
    except Exception:  # pragma: no cover - defensive fallback
        kind = ""
    if "v7" in kind or "7x" in kind:
        # v7x: 2 TCs/chip, 64 MiB VMEM/TC, ~3.2 TB/s HBM.
        # 2 inputs x 2 buffers x 6 MiB = 24 MiB/TC -> fits the 32 MiB default
        # scoped VMEM limit, no vmem_limit_bytes override needed.
        return 2, 6 * 1024 * 1024
    if "v6" in kind:
        # v6e: 1 TC, 32 MiB default scoped VMEM, ~1.4 TB/s HBM.
        return 1, 4 * 1024 * 1024
    # v5e / older / unknown: 1 TC, 16 MiB default scoped VMEM -> conservative.
    return 1, 3 * 1024 * 1024


def _pick_tile_rows(batch, feat, itemsize, tile_bytes):
    row_align = 8 * max(1, 4 // itemsize)                  # 8 (f32) / 16 (bf16) / 32 (i8)
    budget_rows = max(row_align, tile_bytes // max(feat * itemsize, 1))
    tile_rows = (budget_rows // row_align) * row_align
    if tile_rows >= batch:
        return batch          # single full-extent row block (always a legal shape)
    return tile_rows


def _cosine_distance_kernel(x1_ref, x2_ref, out_ref, *,
                            batch, tile_rows, tiles_per_core, ncores):
    if ncores == 1:
        i = pl.program_id(0)          # batch-tile axis ("arbitrary")
        logical_tile = i
    else:
        c = pl.program_id(0)          # core-split axis (CORE_PARALLEL on v7x)
        i = pl.program_id(1)
        logical_tile = c * tiles_per_core + i

    @pl.when(i == 0)
    def _init():
        out_ref[...] = jnp.zeros_like(out_ref)

    x1 = x1_ref[...]       # (tile_rows, D), kept in input dtype (no full-tile promote)
    x2 = x2_ref[...]

    # Lane reductions; accumulate in f32 regardless of input dtype.
    dot = jnp.sum((x1 * x2).astype(jnp.float32), axis=-1, keepdims=True)   # (TB, 1)
    s1 = jnp.sum((x1 * x1).astype(jnp.float32), axis=-1, keepdims=True)
    s2 = jnp.sum((x2 * x2).astype(jnp.float32), axis=-1, keepdims=True)

    # cos = dot / max(||x1||*||x2||, eps)  ==  dot * rsqrt(max(s1*s2, eps^2))
    cos = dot * lax.rsqrt(jnp.maximum(s1 * s2, jnp.float32(_EPS * _EPS)))

    # A tile needs the row mask only if it contains rows >= batch: the partial
    # last logical tile, or a clamped duplicate tail tile on the 2-core split.
    needs_mask = (logical_tile + 1) * tile_rows > batch

    @pl.when(jnp.logical_not(needs_mask))
    def _accumulate_full():
        # Fast path for interior full tiles: no iota/compare/select.
        out_ref[...] = out_ref[...] + jnp.sum(cos)

    @pl.when(needs_mask)
    def _accumulate_masked():
        row = logical_tile * tile_rows + lax.broadcasted_iota(jnp.int32, cos.shape, 0)
        # Keep the select (not multiply-by-mask): padded rows may hold NaN/Inf.
        out_ref[...] = out_ref[...] + jnp.sum(jnp.where(row < batch, cos, 0.0))


def cosine_distance(x1: jax.Array, x2: jax.Array, *, tile_rows: int | None = None) -> jax.Array:
    """Pallas TPU implementation of CosineDistance.forward for (B, D) inputs."""
    assert x1.shape == x2.shape and x1.ndim == 2, "expected matching (B, D) inputs"
    # TODO(synk): >2-D inputs (PyTorch dim=1 similarity + mean over the last axis
    # only) are not handled; this kernel implements the 2-D (B, D) -> scalar case.
    B, D = x1.shape
    itemsize = jnp.dtype(x1.dtype).itemsize

    ncores_hw, tile_bytes = _chip_params()

    if tile_rows is None:
        tile_rows = _pick_tile_rows(B, D, itemsize, tile_bytes)
    tile_rows = min(tile_rows, B)

    tiles_total = pl.cdiv(B, tile_rows)
    ncores = min(ncores_hw, tiles_total)   # never split a single tile across cores
    tiles_per_core = pl.cdiv(tiles_total, ncores)

    kernel = functools.partial(
        _cosine_distance_kernel,
        batch=B, tile_rows=tile_rows, tiles_per_core=tiles_per_core, ncores=ncores)

    if ncores == 1:
        grid = (tiles_total,)
        in_spec = pl.BlockSpec((tile_rows, D), lambda i: (i, 0))
        out_spec = pl.BlockSpec((1, 1, 128), lambda i: (0, 0, 0))
        dim_sem = ("arbitrary",)
    else:
        def in_map(c, i):
            # Clamp so the tail core never requests a block past the array end;
            # its duplicated rows are masked inside the kernel.
            return (jnp.minimum(c * tiles_per_core + i, tiles_total - 1), 0)

        grid = (ncores, tiles_per_core)
        in_spec = pl.BlockSpec((tile_rows, D), in_map)
        out_spec = pl.BlockSpec((1, 1, 128), lambda c, i: (c, 0, 0))
        # Plain "parallel" barely changes codegen; CORE_PARALLEL actually shards
        # the leading axis across the two v7x TensorCores.
        core_sem = getattr(pltpu, "CORE_PARALLEL", "parallel")
        dim_sem = (core_sem, "arbitrary")

    partial_sums = pl.pallas_call(
        kernel,
        out_shape=jax.ShapeDtypeStruct((ncores, 1, 128), jnp.float32),
        grid_spec=pltpu.PrefetchScalarGridSpec(
            num_scalar_prefetch=0,
            grid=grid,
            in_specs=[in_spec, in_spec],
            # One lane-dense (1, 1, 128) partial-sum block per core; constant over
            # the tile axis -> resident accumulator.
            out_specs=out_spec,
        ),
        compiler_params=pltpu.CompilerParams(dimension_semantics=dim_sem),
    )(x1, x2)

    # Every lane of each per-core block carries that core's running sum(cos).
    sum_cos = jnp.sum(partial_sums[:, 0, 0])
    return jnp.float32(1.0) - sum_cos / jnp.float32(B)


def _reference(x1, x2):
    x1 = x1.astype(jnp.float32)
    x2 = x2.astype(jnp.float32)
    dot = jnp.sum(x1 * x2, axis=-1)
    s1 = jnp.sum(x1 * x1, axis=-1)
    s2 = jnp.sum(x2 * x2, axis=-1)
    cos = dot / jnp.maximum(jnp.sqrt(s1) * jnp.sqrt(s2), _EPS)
    return jnp.mean(1.0 - cos)


if __name__ == "__main__":
    key = jax.random.PRNGKey(0)
    k1, k2, k3, k4 = jax.random.split(key, 4)

    # Small shape consistent with the module's (batch, feature) inputs.
    B, D = 8, 128
    x1 = jax.random.normal(k1, (B, D), dtype=jnp.float32)
    x2 = jax.random.normal(k2, (B, D), dtype=jnp.float32)
    out = jax.block_until_ready(cosine_distance(x1, x2))
    ref = jax.block_until_ready(_reference(x1, x2))
    assert jnp.allclose(out, ref, atol=1e-5, rtol=1e-5), (out, ref)

    # Exercise the pipelined path: multiple batch tiles, a partial (masked) last
    # tile, and (on 2-TC chips) the core split with a clamped tail tile.
    B2, D2 = 40, 128
    y1 = jax.random.normal(k3, (B2, D2), dtype=jnp.float32)
    y2 = jax.random.normal(k4, (B2, D2), dtype=jnp.float32)
    out2 = jax.block_until_ready(cosine_distance(y1, y2, tile_rows=16))
    ref2 = jax.block_until_ready(_reference(y1, y2))
    assert jnp.allclose(out2, ref2, atol=1e-5, rtol=1e-5), (out2, ref2)

    print("KERNEL_OK")
</pallas_src>

<mosaic_0001>
module attributes {stable_mosaic.version = 11 : i64} {
  func.func @_cosine_distance_kernel(%arg0: i32, %arg1: memref<8x128xf32, #tpu.memory_space<vmem>>, %arg2: memref<8x128xf32, #tpu.memory_space<vmem>>, %arg3: memref<1x1x128xf32, #tpu.memory_space<vmem>>) attributes {dimension_semantics = [#tpu.dimension_semantics<arbitrary>], iteration_bounds = array<i64: 1>, scalar_prefetch = 0 : i64, scratch_operands = 0 : i64, tpu.core_type = #tpu.core_type<tc>, window_params = [{transform_indices = @transform_0, window_bounds = array<i64: 8, 128>}, {transform_indices = @transform_1, window_bounds = array<i64: 8, 128>}, {pipeline_mode = #tpu.pipeline_mode<synchronous>, transform_indices = @transform_2, window_bounds = array<i64: 1, 1, 128>}]} {
    %c0_i32 = arith.constant 0 : i32
    %0 = arith.cmpi eq, %arg0, %c0_i32 : i32
    %1 = arith.extui %0 : i1 to i32
    %c0_i32_0 = arith.constant 0 : i32
    %2 = arith.cmpi ne, %1, %c0_i32_0 : i32
    scf.if %2 {
      %cst_10 = arith.constant 0.000000e+00 : f32
      %27 = vector.broadcast %cst_10 : f32 to vector<1x1x128xf32>
      %c0_11 = arith.constant 0 : index
      %c0_12 = arith.constant 0 : index
      %c0_13 = arith.constant 0 : index
      %28 = vector.load %arg3[%c0_11, %c0_12, %c0_13] : memref<1x1x128xf32, #tpu.memory_space<vmem>>, vector<1x1x128xf32>
      tpu.vector_store %arg3[%c0_11, %c0_12, %c0_13], %27 {strides = array<i32>} : memref<1x1x128xf32, #tpu.memory_space<vmem>>, vector<1x1x128xf32>,
    } else {
    }
    %c0 = arith.constant 0 : index
    %c0_1 = arith.constant 0 : index
    %3 = vector.load %arg1[%c0, %c0_1] : memref<8x128xf32, #tpu.memory_space<vmem>>, vector<8x128xf32>
    %c0_2 = arith.constant 0 : index
    %c0_3 = arith.constant 0 : index
    %4 = vector.load %arg2[%c0_2, %c0_3] : memref<8x128xf32, #tpu.memory_space<vmem>>, vector<8x128xf32>
    %5 = arith.mulf %3, %4 : vector<8x128xf32>
    %cst = arith.constant dense<0.000000e+00> : vector<8xf32>
    %6 = vector.multi_reduction <add>, %5, %cst [1] : vector<8x128xf32> to vector<8xf32>
    %7 = vector.shape_cast %6 : vector<8xf32> to vector<8x1xf32>
    %8 = arith.mulf %3, %3 : vector<8x128xf32>
    %cst_4 = arith.constant dense<0.000000e+00> : vector<8xf32>
    %9 = vector.multi_reduction <add>, %8, %cst_4 [1] : vector<8x128xf32> to vector<8xf32>
    %10 = vector.shape_cast %9 : vector<8xf32> to vector<8x1xf32>
    %11 = arith.mulf %4, %4 : vector<8x128xf32>
    %cst_5 = arith.constant dense<0.000000e+00> : vector<8xf32>
    %12 = vector.multi_reduction <add>, %11, %cst_5 [1] : vector<8x128xf32> to vector<8xf32>
    %13 = vector.shape_cast %12 : vector<8xf32> to vector<8x1xf32>
    %14 = arith.mulf %10, %13 : vector<8x1xf32>
    %cst_6 = arith.constant 1.000000e-16 : f32
    %15 = vector.broadcast %cst_6 : f32 to vector<8x1xf32>
    %16 = arith.maximumf %14, %15 : vector<8x1xf32>
    %17 = math.rsqrt %16 : vector<8x1xf32>
    %18 = arith.mulf %7, %17 : vector<8x1xf32>
    %c1_i32 = arith.constant 1 : i32
    %19 = arith.addi %arg0, %c1_i32 : i32
    %c8_i32 = arith.constant 8 : i32
    %20 = arith.muli %19, %c8_i32 : i32
    %c8_i32_7 = arith.constant 8 : i32
    %21 = arith.cmpi sgt, %20, %c8_i32_7 : i32
    %true = arith.constant true
    %22 = arith.xori %21, %true : i1
    %23 = arith.extui %22 : i1 to i32
    %c0_i32_8 = arith.constant 0 : i32
    %24 = arith.cmpi ne, %23, %c0_i32_8 : i32
    scf.if %24 {
      %c0_10 = arith.constant 0 : index
      %c0_11 = arith.constant 0 : index
      %c0_12 = arith.constant 0 : index
      %27 = vector.load %arg3[%c0_10, %c0_11, %c0_12] : memref<1x1x128xf32, #tpu.memory_space<vmem>>, vector<1x1x128xf32>
      %28 = vector.shape_cast %18 : vector<8x1xf32> to vector<1x8x1xf32>
      %cst_13 = arith.constant dense<0.000000e+00> : vector<1xf32>
      %29 = vector.multi_reduction <add>, %28, %cst_13 [1, 2] : vector<1x8x1xf32> to vector<1xf32>
      %30 = vector.shape_cast %29 : vector<1xf32> to vector<1x1x1xf32>
      %31 = vector.extract %30[0, 0, 0] : f32 from vector<1x1x1xf32>
      %32 = vector.broadcast %31 : f32 to vector<1x1x128xf32>
      %33 = arith.addf %27, %32 : vector<1x1x128xf32>
      %c0_14 = arith.constant 0 : index
      %c0_15 = arith.constant 0 : index
      %c0_16 = arith.constant 0 : index
      %34 = vector.load %arg3[%c0_14, %c0_15, %c0_16] : memref<1x1x128xf32, #tpu.memory_space<vmem>>, vector<1x1x128xf32>
      tpu.vector_store %arg3[%c0_14, %c0_15, %c0_16], %33 {strides = array<i32>} : memref<1x1x128xf32, #tpu.memory_space<vmem>>, vector<1x1x128xf32>,
    } else {
    }
    %25 = arith.extui %21 : i1 to i32
    %c0_i32_9 = arith.constant 0 : i32
    %26 = arith.cmpi ne, %25, %c0_i32_9 : i32
    scf.if %26 {
      %c8_i32_10 = arith.constant 8 : i32
      %27 = arith.muli %arg0, %c8_i32_10 : i32
      %28 = tpu.iota {dimensions = array<i32: 0>} : vector<8x1xi32>
      %29 = vector.broadcast %27 : i32 to vector<8x1xi32>
      %30 = arith.addi %29, %28 : vector<8x1xi32>
      %c0_11 = arith.constant 0 : index
      %c0_12 = arith.constant 0 : index
      %c0_13 = arith.constant 0 : index
      %31 = vector.load %arg3[%c0_11, %c0_12, %c0_13] : memref<1x1x128xf32, #tpu.memory_space<vmem>>, vector<1x1x128xf32>
      %c8_i32_14 = arith.constant 8 : i32
      %32 = vector.broadcast %c8_i32_14 : i32 to vector<8x1xi32>
      %33 = arith.cmpi slt, %30, %32 : vector<8x1xi32>
      %cst_15 = arith.constant 0.000000e+00 : f32
      %34 = vector.broadcast %cst_15 : f32 to vector<8x1xf32>
      %35 = arith.select %33, %18, %34 : vector<8x1xi1>, vector<8x1xf32>
      %36 = vector.shape_cast %35 : vector<8x1xf32> to vector<1x8x1xf32>
      %cst_16 = arith.constant dense<0.000000e+00> : vector<1xf32>
      %37 = vector.multi_reduction <add>, %36, %cst_16 [1, 2] : vector<1x8x1xf32> to vector<1xf32>
      %38 = vector.shape_cast %37 : vector<1xf32> to vector<1x1x1xf32>
      %39 = vector.extract %38[0, 0, 0] : f32 from vector<1x1x1xf32>
      %40 = vector.broadcast %39 : f32 to vector<1x1x128xf32>
      %41 = arith.addf %31, %40 : vector<1x1x128xf32>
      %c0_17 = arith.constant 0 : index
      %c0_18 = arith.constant 0 : index
      %c0_19 = arith.constant 0 : index
      %42 = vector.load %arg3[%c0_17, %c0_18, %c0_19] : memref<1x1x128xf32, #tpu.memory_space<vmem>>, vector<1x1x128xf32>
      tpu.vector_store %arg3[%c0_17, %c0_18, %c0_19], %41 {strides = array<i32>} : memref<1x1x128xf32, #tpu.memory_space<vmem>>, vector<1x1x128xf32>,
    } else {
    }
    return
  }
  func.func @transform_0(%arg0: i32) -> (i32, i32) {
    %c0_i32 = arith.constant 0 : i32
    %c0_i32_0 = arith.constant 0 : i32
    return %arg0, %c0_i32 : i32, i32
  }
  func.func @transform_1(%arg0: i32) -> (i32, i32) {
    %c0_i32 = arith.constant 0 : i32
    %c0_i32_0 = arith.constant 0 : i32
    return %arg0, %c0_i32 : i32, i32
  }
  func.func @transform_2(%arg0: i32) -> (i32, i32, i32) {
    %c0_i32 = arith.constant 0 : i32
    %c0_i32_0 = arith.constant 0 : i32
    %c0_i32_1 = arith.constant 0 : i32
    %c0_i32_2 = arith.constant 0 : i32
    return %c0_i32, %c0_i32_0, %c0_i32_1 : i32, i32, i32
  }
}

</mosaic_0001>

<llo_original>
// kernel: tpu_custom_call.1
$region0: #{tpu_custom_call.1}
  #allocation0 [shape = 'u32[]', space=smem, size = 0x4, offset = 0x4, fixed_abs, tag = 'smem constant byte address 0x4 - core index']
  #allocation1 [shape = 'u32[144,128]{1,0:T(1,128)}', space=vmem, size = 0x12000, scoped, tag = 'internal scratch']
  %s0 = inlined_call_operand.hbm [shape: f32[8,128], index: 0, kind: input, shape index: {}]
  %s1 = inlined_call_operand.hbm [shape: f32[8,128], index: 1, kind: input, shape index: {}]
  %s2 = inlined_call_operand.hbm [shape: f32[1,1,128], index: 2, kind: output, shape index: {}]
  %s3 = sld [smem:[#allocation0]]
  $region38: #{tpu_custom_call.1} parent=0
    _
  %s5 = ssub.s32 1, %s3
  %s6 = scalar_select 0, %s5, %s3
  $region1: #{tpu_custom_call.1} parent=0
    #allocation2 [shape = 'u8[4096]{0}', space=vmem, size = 0x1000, scoped, tag = 'input window, operand 0, single buffered']
    #allocation3 [shape = 's32[1]{0}', space=sflag, size = 0x4, scoped, tag = 'scoped memory for tpu_custom_call.1']
    #allocation4 [shape = 's32[1]{0}', space=sflag, size = 0x4, scoped, tag = 'scoped memory for tpu_custom_call.1']
    #allocation5 [shape = 'u8[4096]{0}', space=vmem, size = 0x1000, scoped, tag = 'input window, operand 1, single buffered']
    #allocation6 [shape = 's32[1]{0}', space=sflag, size = 0x4, scoped, tag = 'scoped memory for tpu_custom_call.1']
    #allocation7 [shape = 'u8[512]{0}', space=vmem, size = 0x400, scoped, tag = 'output window, operand 0, single buffered']
    %7 = vsyncpa [#allocation3], 0
    %8 = vsyncpa [#allocation6], 0
    %9 = vsyncpa [#allocation4], 0
    // Predicated region
    $region2: #{tpu_custom_call.1} parent=1 // pred_check
      _
    $region3: #{tpu_custom_call.1} parent=1 // pred_check_branch
      %11 = sbr.rel (0) target = $region5
    $region4: #{tpu_custom_call.1} parent=1 // pred_region
      %s13 = ssub.s32 128, 128
      %14 = vsyncadd [#allocation3], %s13
      %s16 = sshll.u32 [#allocation2], 4
      %s17 = int_to_ptr.vmem [resolvable:$true] %s16
      %19 = dma.hbm_to_vmem [thread:$0]  %s0, 128, %s17, [#allocation3]
    $region5: #{tpu_custom_call.1} parent=1 // pred_fallthru
      _
    // Predicated region
    $region6: #{tpu_custom_call.1} parent=1 // pred_check
      _
    $region7: #{tpu_custom_call.1} parent=1 // pred_check_branch
      %21 = sbr.rel (0) target = $region9
    $region8: #{tpu_custom_call.1} parent=1 // pred_region
      %s23 = ssub.s32 128, 128
      %24 = vsyncadd [#allocation6], %s23
      %s26 = sshll.u32 [#allocation5], 4
      %s27 = int_to_ptr.vmem [resolvable:$true] %s26
      %29 = dma.hbm_to_vmem [thread:$0]  %s1, 128, %s27, [#allocation6]
    $region9: #{tpu_custom_call.1} parent=1 // pred_fallthru
      _
    // Predicated region
    $region10: #{tpu_custom_call.1} parent=1 // pred_check
      _
    $region11: #{tpu_custom_call.1} parent=1 // pred_check_branch
      %31 = sbr.rel (0) target = $region13
    $region12: #{tpu_custom_call.1} parent=1 // pred_region
      %32 = dma.done [#allocation3], 128
    $region13: #{tpu_custom_call.1} parent=1 // pred_fallthru
      _
    // Predicated region
    $region14: #{tpu_custom_call.1} parent=1 // pred_check
      _
    $region15: #{tpu_custom_call.1} parent=1 // pred_check_branch
      %34 = sbr.rel (0) target = $region17
    $region16: #{tpu_custom_call.1} parent=1 // pred_region
      %35 = dma.done [#allocation6], 128
    $region17: #{tpu_custom_call.1} parent=1 // pred_fallthru
      _
    %p36 = scmp.eq.s32.totalorder 0, 0
    // Predicated region
    $region18: #{tpu_custom_call.1} parent=1 // pred_check
      %p37 = pneg %p36
    $region19: #{tpu_custom_call.1} parent=1 // pred_check_branch
      %39 = sbr.rel (%p37) target = $region21
    $region20: #{tpu_custom_call.1} parent=1 // pred_region
      %40 = vst [vmem:[#allocation7] sm:$0x1] 0.0
    $region21: #{tpu_custom_call.1} parent=1 // pred_fallthru
      _
    %v41 = vld [vmem:[#allocation2] sm:$0xff]
    %v42 = vld [vmem:[#allocation5] sm:$0xff]
    %v43 = vmul.f32 %v41, %v42
    %44 = vadd.xlane.f32.xlu0 %v43
    %v45 = vpop.xlane.xlu0 %44
    %v46 = vmul.f32 %v41, %v41
    %47 = vadd.xlane.f32.xlu0 %v46
    %v48 = vpop.xlane.xlu0 %47
    %v49 = vmul.f32 %v42, %v42
    %50 = vadd.xlane.f32.xlu0 %v49
    %v51 = vpop.xlane.xlu0 %50
    %v52 = vmul.f32 %v48, %v51
    %v53 = vmax.f32 %v52, 1e-16
    %v54 = vrsqrt.pop %v53
    %v55 = vmul.f32 %v45, %v54
    %s56 = sadd.s32 0, 1
    %s57 = smul.u32 %s56, 8
    %p58 = scmp.gt.s32.totalorder %s57, 8
    %p59 = scmp.le.s32.totalorder %s57, 8
    // Predicated region
    $region22: #{tpu_custom_call.1} parent=1 // pred_check
      %p60 = pneg %p59
    $region23: #{tpu_custom_call.1} parent=1 // pred_check_branch
      %62 = sbr.rel (%p60) target = $region25
    $region24: #{tpu_custom_call.1} parent=1 // pred_region
      %v63 = vld [vmem:[#allocation7] sm:$0x1]
      %vm64 = vcmask 7168
      %v65 = vsel %vm64, %v55, 0.0
      %66 = vadd.xlane.f32.xlu0 %v65
      %v67 = vpop.xlane.xlu0 %66
      %v68 = vrot.slane %v67, 4
      %v69 = vadd.f32 %v67, %v68
      %v70 = vrot.slane %v69, 2
      %v71 = vadd.f32 %v69, %v70
      %v72 = vrot.slane %v71, 1
      %v73 = vadd.f32 %v71, %v72
      %s74 = vtos %v73
      %v75 = vstv %s74
      %v76 = vadd.f32 %v63, %v75
      %77 = vst [vmem:[#allocation7] sm:$0x1] %v76
    $region25: #{tpu_custom_call.1} parent=1 // pred_fallthru
      _
    // Predicated region
    $region26: #{tpu_custom_call.1} parent=1 // pred_check
      %p78 = pneg %p58
    $region27: #{tpu_custom_call.1} parent=1 // pred_check_branch
      %80 = sbr.rel (%p78) target = $region29
    $region28: #{tpu_custom_call.1} parent=1 // pred_region
      %s81 = smul.u32 0, 8
      %v82 = vlaneseq
      %v83 = vshrl.u32 %v82, 7
      %v84 = vstv %s81
      %v85 = vadd.s32 %v84, %v83
      %v86 = vld [vmem:[#allocation7] sm:$0x1]
      %vm87 = vcmp.lt.s32.totalorder %v85, 8
      %v88 = vsel %vm87, %v55, 0.0
      %vm89 = vcmask 7168
      %v90 = vsel %vm89, %v88, 0.0
      %91 = vadd.xlane.f32.xlu0 %v90
      %v92 = vpop.xlane.xlu0 %91
      %v93 = vrot.slane %v92, 4
      %v94 = vadd.f32 %v92, %v93
      %v95 = vrot.slane %v94, 2
      %v96 = vadd.f32 %v94, %v95
      %v97 = vrot.slane %v96, 1
      %v98 = vadd.f32 %v96, %v97
      %s99 = vtos %v98
      %v100 = vstv %s99
      %v101 = vadd.f32 %v86, %v100
      %102 = vst [vmem:[#allocation7] sm:$0x1] %v101
    $region29: #{tpu_custom_call.1} parent=1 // pred_fallthru
      _
    // Predicated region
    $region30: #{tpu_custom_call.1} parent=1 // pred_check
      _
    $region31: #{tpu_custom_call.1} parent=1 // pred_check_branch
      %104 = sbr.rel (0) target = $region33
    $region32: #{tpu_custom_call.1} parent=1 // pred_region
      %s106 = ssub.s32 16, 16
      %107 = vsyncadd [#allocation4], %s106
      %s109 = sshll.u32 [#allocation7], 4
      %s110 = int_to_ptr.vmem [resolvable:$true] %s109
      %112 = dma.vmem_to_hbm [thread:$0]  %s110, 16, %s2, [#allocation4]
    $region33: #{tpu_custom_call.1} parent=1 // pred_fallthru
      _
    // Predicated region
    $region34: #{tpu_custom_call.1} parent=1 // pred_check
      _
    $region35: #{tpu_custom_call.1} parent=1 // pred_check_branch
      %114 = sbr.rel (0) target = $region37
    $region36: #{tpu_custom_call.1} parent=1 // pred_region
      %115 = dma.done [#allocation4], 16
    $region37: #{tpu_custom_call.1} parent=1 // pred_fallthru
      _
    %116 = vsyncpa [#allocation3], 1
    %117 = vsyncpa [#allocation6], 1
    %118 = vsyncpa [#allocation4], 1

</llo_original>
